<compile_context>
chip_gen: v5e
topology: v5e:2x2
jax: 0.10.0
libtpu: 0.0.40
codegen_flags: <defaults>
</compile_context>

<pallas_src>
import math
import functools

import jax
import jax.numpy as jnp
from jax import lax
from jax.experimental import pallas as pl
from jax.experimental.pallas import tpu as pltpu


def _round_up(x, m):
    return ((x + m - 1) // m) * m


def _cdiv(a, b):
    return (a + b - 1) // b


def _input_embeddings_kernel(ids_ref, emb_hbm, out_ref, buf, sem, *,
                             scale, tok_blk, n_inner):
    # ids_ref : (n_pad,) int32 token ids in SMEM (scalar prefetch)
    # emb_hbm : (vocab, d_model) embedding table left in HBM (pl.ANY)
    # out_ref : (tok_blk, d_model) output block in VMEM
    # buf     : (2, tok_blk, d_model) VMEM gather buffer (double-buffered)
    # sem     : (2,) DMA semaphores, one per buffer slot (shared by a slot's rows)
    i = pl.program_id(0)              # outer axis: "parallel" (megacore shard on v7x)
    j = pl.program_id(1)              # inner axis: "arbitrary" (sequential per core)
    blk = i * n_inner + j             # flat token-block index
    slot = j % 2

    def start_fetch(block_idx, slot_):
        base = block_idx * tok_blk

        def body(r, carry):
            tok = ids_ref[base + r]                       # scalar read from SMEM
            pltpu.make_async_copy(emb_hbm.at[tok],        # one table row from HBM
                                  buf.at[slot_, r],
                                  sem.at[slot_]).start()
            return carry

        lax.fori_loop(0, tok_blk, body, 0, unroll=8)

    # Prime: the first inner step of each outer chunk fetches its own rows.
    @pl.when(j == 0)
    def _():
        start_fetch(blk, slot)

    # Cross-step prefetch BEFORE the wait: it targets the other slot (no hazard), so
    # descriptor issue + SMEM id reads overlap the in-flight DMAs of this slot.
    @pl.when(j + 1 < pl.num_programs(1))
    def _():
        start_fetch(blk + 1, 1 - slot)

    # Aggregate wait: one descriptor describing the whole slot (tok_blk * d_model *
    # itemsize bytes) on the shared semaphore, matching the sum of the row copies.
    pltpu.make_async_copy(buf.at[1 - slot], buf.at[slot], sem.at[slot]).wait()

    # Scale in the table's native dtype (bf16 stays bf16; f32 stays f32).
    out_ref[...] = (buf[slot] * scale).astype(out_ref.dtype)


def _embed_chunk(ids_flat, emb_table, tok_blk):
    """Embed one flat id chunk: returns (n_tok, d_model) = emb_table[ids] * sqrt(d)."""
    vocab, d_model = emb_table.shape
    n_tok = ids_flat.shape[0]
    itemsize = jnp.dtype(emb_table.dtype).itemsize

    # --- VMEM budget: 2x gather scratch + 2x output double-buffer <= ~24 MiB ------
    budget = 24 * 1024 * 1024
    tok_blk = _round_up(max(tok_blk, 8), 8)
    vmem_cap_blk = (budget // (4 * d_model * itemsize)) // 8 * 8
    if vmem_cap_blk >= 8:
        tok_blk = min(tok_blk, vmem_cap_blk)
    tok_blk = min(tok_blk, _round_up(n_tok, 8))
    tok_blk = max(tok_blk, 8)

    # --- Grid: outer axis is always 2 when there are >= 2 blocks (v7x 2x TC) -------
    n_blocks = _cdiv(n_tok, tok_blk)
    n_outer = 2 if n_blocks >= 2 else 1
    n_blocks = _round_up(n_blocks, n_outer)
    n_inner = n_blocks // n_outer
    n_pad = n_blocks * tok_blk

    if n_pad != n_tok:
        ids_flat = jnp.pad(ids_flat, (0, n_pad - n_tok))   # pad with id 0 (valid row)

    blk_bytes = tok_blk * d_model * itemsize
    vmem_limit = int(4 * blk_bytes + (8 << 20))             # buffers + headroom

    kernel = functools.partial(
        _input_embeddings_kernel,
        scale=math.sqrt(d_model), tok_blk=tok_blk, n_inner=n_inner)

    out = pl.pallas_call(
        kernel,
        out_shape=jax.ShapeDtypeStruct((n_pad, d_model), emb_table.dtype),
        grid_spec=pltpu.PrefetchScalarGridSpec(
            num_scalar_prefetch=1,                 # ids -> SMEM, visible to the kernel
            grid=(n_outer, n_inner),
            in_specs=[
                # Embedding table stays in HBM; rows are DMA-gathered manually.
                pl.BlockSpec(memory_space=pl.ANY),
            ],
            out_specs=pl.BlockSpec((tok_blk, d_model),
                                   lambda i, j, ids: (i * n_inner + j, 0)),
            scratch_shapes=[
                pltpu.VMEM((2, tok_blk, d_model), emb_table.dtype),
                pltpu.SemaphoreType.DMA((2,)),
            ]),
        compiler_params=pltpu.CompilerParams(
            dimension_semantics=("parallel", "arbitrary"),
            vmem_limit_bytes=vmem_limit),
    )(ids_flat, emb_table)

    return out[:n_tok]


def input_embeddings(x_ids, emb_table, *, tok_blk=256, max_tokens_per_call=1 << 16):
    """x_ids: (batch, seq) integer token ids; emb_table: (vocab, d_model).
    Returns (batch, seq, d_model) = emb_table[x_ids] * sqrt(d_model)."""
    batch, seq = x_ids.shape
    vocab, d_model = emb_table.shape
    n_tok = batch * seq

    ids_flat = jnp.ravel(x_ids).astype(jnp.int32)
    ids_flat = jnp.clip(ids_flat, 0, vocab - 1)   # cheap bounds safety (no OOB DMAs)

    # Chunk very long token streams so SMEM id usage per pallas_call stays bounded.
    pieces = []
    for start in range(0, n_tok, max_tokens_per_call):
        piece = ids_flat[start:start + max_tokens_per_call]
        pieces.append(_embed_chunk(piece, emb_table, tok_blk))
    out_flat = pieces[0] if len(pieces) == 1 else jnp.concatenate(pieces, axis=0)

    return out_flat.reshape(batch, seq, d_model)


if __name__ == "__main__":
    batch, seq = 2, 32
    vocab_size, d_model = 64, 128     # d_model multiple of 128 -> lane-dense stores

    key = jax.random.PRNGKey(0)
    k_emb, k_ids, k_ids2, k_ids3 = jax.random.split(key, 4)

    # Deterministic synthetic parameters (nn.Embedding weight: (vocab, d_model)).
    emb_table = jax.random.normal(k_emb, (vocab_size, d_model), dtype=jnp.float32)
    x_ids = jax.random.randint(k_ids, (batch, seq), 0, vocab_size, dtype=jnp.int32)

    # Small tok_blk so the test exercises priming, prefetch-before-wait, both buffer
    # slots, and the 2-way outer split (grid = (2, 4) here).
    out = input_embeddings(x_ids, emb_table, tok_blk=8)
    out = jax.block_until_ready(out)

    ref = emb_table[x_ids] * math.sqrt(d_model)
    assert out.shape == (batch, seq, d_model)
    assert jnp.allclose(out, ref, atol=1e-5, rtol=1e-5), "mismatch vs reference"

    # Non-divisible token count -> exercises the padding / single-block path.
    x_ids2 = jax.random.randint(k_ids2, (2, 7), 0, vocab_size, dtype=jnp.int32)
    out2 = jax.block_until_ready(input_embeddings(x_ids2, emb_table, tok_blk=16))
    ref2 = emb_table[x_ids2] * math.sqrt(d_model)
    assert out2.shape == (2, 7, d_model)
    assert jnp.allclose(out2, ref2, atol=1e-5, rtol=1e-5), "mismatch vs reference (pad)"

    # Default tok_blk path (clamped to the token count) with an odd shape.
    x_ids3 = jax.random.randint(k_ids3, (3, 50), 0, vocab_size, dtype=jnp.int32)
    out3 = jax.block_until_ready(input_embeddings(x_ids3, emb_table))
    ref3 = emb_table[x_ids3] * math.sqrt(d_model)
    assert out3.shape == (3, 50, d_model)
    assert jnp.allclose(out3, ref3, atol=1e-5, rtol=1e-5), "mismatch vs reference (def)"

    print("KERNEL_OK")
</pallas_src>

<mosaic_0001>
module attributes {stable_mosaic.version = 11 : i64} {
  func.func @_input_embeddings_kernel(%arg0: i32, %arg1: i32, %arg2: memref<64xi32, #tpu.memory_space<smem>>, %arg3: memref<64x128xf32, #tpu.memory_space<any>>, %arg4: memref<8x128xf32, #tpu.memory_space<vmem>>, %arg5: memref<2x8x128xf32, #tpu.memory_space<vmem>>, %arg6: memref<2x!tpu.dma_semaphore, #tpu.memory_space<semaphore_mem>>) attributes {dimension_semantics = [#tpu.dimension_semantics<parallel>, #tpu.dimension_semantics<arbitrary>], iteration_bounds = array<i64: 2, 4>, scalar_prefetch = 1 : i64, scratch_operands = 2 : i64, tpu.core_type = #tpu.core_type<tc>, window_params = [{}, {transform_indices = @transform_1, window_bounds = array<i64: 8, 128>}]} {
    %c4_i32 = arith.constant 4 : i32
    %0 = arith.muli %arg0, %c4_i32 : i32
    %1 = arith.addi %0, %arg1 : i32
    %c2_i32 = arith.constant 2 : i32
    %c0_i32 = arith.constant 0 : i32
    %2 = arith.cmpi eq, %c2_i32, %c0_i32 : i32
    %c1_i32 = arith.constant 1 : i32
    %3 = arith.select %2, %c1_i32, %c2_i32 : i32
    %4 = arith.remsi %arg1, %3 : i32
    %c0_i32_0 = arith.constant 0 : i32
    %5 = arith.cmpi ne, %4, %c0_i32_0 : i32
    %c0_i32_1 = arith.constant 0 : i32
    %6 = arith.cmpi slt, %4, %c0_i32_1 : i32
    %c0_i32_2 = arith.constant 0 : i32
    %7 = arith.cmpi slt, %3, %c0_i32_2 : i32
    %8 = arith.xori %6, %7 : i1
    %9 = arith.andi %8, %5 : i1
    %10 = arith.addi %4, %3 : i32
    %11 = arith.select %9, %10, %4 : i32
    %c0_i32_3 = arith.constant 0 : i32
    %12 = arith.cmpi eq, %arg1, %c0_i32_3 : i32
    %13 = arith.extui %12 : i1 to i32
    %c0_i32_4 = arith.constant 0 : i32
    %14 = arith.cmpi ne, %13, %c0_i32_4 : i32
    scf.if %14 {
      %c8_i32 = arith.constant 8 : i32
      %32 = arith.muli %1, %c8_i32 : i32
      %c0_i32_16 = arith.constant 0 : i32
      %33 = arith.addi %32, %c0_i32_16 : i32
      %34 = arith.index_cast %33 : i32 to index
      %35 = memref.load %arg2[%34] : memref<64xi32, #tpu.memory_space<smem>>
      %c0_i32_17 = arith.constant 0 : i32
      %36 = tpu.memref_slice %arg3[%35, %c0_i32_17] : memref<64x128xf32, #tpu.memory_space<any>> -> memref<1x128xf32, #tpu.memory_space<any>>
      %37 = tpu.memref_squeeze %36 : memref<1x128xf32, #tpu.memory_space<any>> -> memref<128xf32, #tpu.memory_space<any>>
      %c0_i32_18 = arith.constant 0 : i32
      %38 = tpu.memref_slice %arg5[%11, %c0_i32_16, %c0_i32_18] : memref<2x8x128xf32, #tpu.memory_space<vmem>> -> memref<1x1x128xf32, #tpu.memory_space<vmem>>
      %39 = tpu.memref_squeeze %38 : memref<1x1x128xf32, #tpu.memory_space<vmem>> -> memref<128xf32, #tpu.memory_space<vmem>>
      %40 = tpu.memref_slice %arg6[%11] : memref<2x!tpu.dma_semaphore, #tpu.memory_space<semaphore_mem>> -> memref<1x!tpu.dma_semaphore, #tpu.memory_space<semaphore_mem>>
      %41 = tpu.memref_squeeze %40 : memref<1x!tpu.dma_semaphore, #tpu.memory_space<semaphore_mem>> -> memref<!tpu.dma_semaphore, #tpu.memory_space<semaphore_mem>>
      tpu.enqueue_dma source(%37 : memref<128xf32, #tpu.memory_space<any>>) target(%39 : memref<128xf32, #tpu.memory_space<vmem>>) target_semaphore(%41 : memref<!tpu.dma_semaphore, #tpu.memory_space<semaphore_mem>>)
      %c1_i32_19 = arith.constant 1 : i32
      %42 = arith.addi %32, %c1_i32_19 : i32
      %43 = arith.index_cast %42 : i32 to index
      %44 = memref.load %arg2[%43] : memref<64xi32, #tpu.memory_space<smem>>
      %c0_i32_20 = arith.constant 0 : i32
      %45 = tpu.memref_slice %arg3[%44, %c0_i32_20] : memref<64x128xf32, #tpu.memory_space<any>> -> memref<1x128xf32, #tpu.memory_space<any>>
      %46 = tpu.memref_squeeze %45 : memref<1x128xf32, #tpu.memory_space<any>> -> memref<128xf32, #tpu.memory_space<any>>
      %c0_i32_21 = arith.constant 0 : i32
      %47 = tpu.memref_slice %arg5[%11, %c1_i32_19, %c0_i32_21] : memref<2x8x128xf32, #tpu.memory_space<vmem>> -> memref<1x1x128xf32, #tpu.memory_space<vmem>>
      %48 = tpu.memref_squeeze %47 : memref<1x1x128xf32, #tpu.memory_space<vmem>> -> memref<128xf32, #tpu.memory_space<vmem>>
      %49 = tpu.memref_slice %arg6[%11] : memref<2x!tpu.dma_semaphore, #tpu.memory_space<semaphore_mem>> -> memref<1x!tpu.dma_semaphore, #tpu.memory_space<semaphore_mem>>
      %50 = tpu.memref_squeeze %49 : memref<1x!tpu.dma_semaphore, #tpu.memory_space<semaphore_mem>> -> memref<!tpu.dma_semaphore, #tpu.memory_space<semaphore_mem>>
      tpu.enqueue_dma source(%46 : memref<128xf32, #tpu.memory_space<any>>) target(%48 : memref<128xf32, #tpu.memory_space<vmem>>) target_semaphore(%50 : memref<!tpu.dma_semaphore, #tpu.memory_space<semaphore_mem>>)
      %c2_i32_22 = arith.constant 2 : i32
      %51 = arith.addi %32, %c2_i32_22 : i32
      %52 = arith.index_cast %51 : i32 to index
      %53 = memref.load %arg2[%52] : memref<64xi32, #tpu.memory_space<smem>>
      %c0_i32_23 = arith.constant 0 : i32
      %54 = tpu.memref_slice %arg3[%53, %c0_i32_23] : memref<64x128xf32, #tpu.memory_space<any>> -> memref<1x128xf32, #tpu.memory_space<any>>
      %55 = tpu.memref_squeeze %54 : memref<1x128xf32, #tpu.memory_space<any>> -> memref<128xf32, #tpu.memory_space<any>>
      %c0_i32_24 = arith.constant 0 : i32
      %56 = tpu.memref_slice %arg5[%11, %c2_i32_22, %c0_i32_24] : memref<2x8x128xf32, #tpu.memory_space<vmem>> -> memref<1x1x128xf32, #tpu.memory_space<vmem>>
      %57 = tpu.memref_squeeze %56 : memref<1x1x128xf32, #tpu.memory_space<vmem>> -> memref<128xf32, #tpu.memory_space<vmem>>
      %58 = tpu.memref_slice %arg6[%11] : memref<2x!tpu.dma_semaphore, #tpu.memory_space<semaphore_mem>> -> memref<1x!tpu.dma_semaphore, #tpu.memory_space<semaphore_mem>>
      %59 = tpu.memref_squeeze %58 : memref<1x!tpu.dma_semaphore, #tpu.memory_space<semaphore_mem>> -> memref<!tpu.dma_semaphore, #tpu.memory_space<semaphore_mem>>
      tpu.enqueue_dma source(%55 : memref<128xf32, #tpu.memory_space<any>>) target(%57 : memref<128xf32, #tpu.memory_space<vmem>>) target_semaphore(%59 : memref<!tpu.dma_semaphore, #tpu.memory_space<semaphore_mem>>)
      %c3_i32 = arith.constant 3 : i32
      %60 = arith.addi %32, %c3_i32 : i32
      %61 = arith.index_cast %60 : i32 to index
      %62 = memref.load %arg2[%61] : memref<64xi32, #tpu.memory_space<smem>>
      %c0_i32_25 = arith.constant 0 : i32
      %63 = tpu.memref_slice %arg3[%62, %c0_i32_25] : memref<64x128xf32, #tpu.memory_space<any>> -> memref<1x128xf32, #tpu.memory_space<any>>
      %64 = tpu.memref_squeeze %63 : memref<1x128xf32, #tpu.memory_space<any>> -> memref<128xf32, #tpu.memory_space<any>>
      %c0_i32_26 = arith.constant 0 : i32
      %65 = tpu.memref_slice %arg5[%11, %c3_i32, %c0_i32_26] : memref<2x8x128xf32, #tpu.memory_space<vmem>> -> memref<1x1x128xf32, #tpu.memory_space<vmem>>
      %66 = tpu.memref_squeeze %65 : memref<1x1x128xf32, #tpu.memory_space<vmem>> -> memref<128xf32, #tpu.memory_space<vmem>>
      %67 = tpu.memref_slice %arg6[%11] : memref<2x!tpu.dma_semaphore, #tpu.memory_space<semaphore_mem>> -> memref<1x!tpu.dma_semaphore, #tpu.memory_space<semaphore_mem>>
      %68 = tpu.memref_squeeze %67 : memref<1x!tpu.dma_semaphore, #tpu.memory_space<semaphore_mem>> -> memref<!tpu.dma_semaphore, #tpu.memory_space<semaphore_mem>>
      tpu.enqueue_dma source(%64 : memref<128xf32, #tpu.memory_space<any>>) target(%66 : memref<128xf32, #tpu.memory_space<vmem>>) target_semaphore(%68 : memref<!tpu.dma_semaphore, #tpu.memory_space<semaphore_mem>>)
      %c4_i32_27 = arith.constant 4 : i32
      %69 = arith.addi %32, %c4_i32_27 : i32
      %70 = arith.index_cast %69 : i32 to index
      %71 = memref.load %arg2[%70] : memref<64xi32, #tpu.memory_space<smem>>
      %c0_i32_28 = arith.constant 0 : i32
      %72 = tpu.memref_slice %arg3[%71, %c0_i32_28] : memref<64x128xf32, #tpu.memory_space<any>> -> memref<1x128xf32, #tpu.memory_space<any>>
      %73 = tpu.memref_squeeze %72 : memref<1x128xf32, #tpu.memory_space<any>> -> memref<128xf32, #tpu.memory_space<any>>
      %c0_i32_29 = arith.constant 0 : i32
      %74 = tpu.memref_slice %arg5[%11, %c4_i32_27, %c0_i32_29] : memref<2x8x128xf32, #tpu.memory_space<vmem>> -> memref<1x1x128xf32, #tpu.memory_space<vmem>>
      %75 = tpu.memref_squeeze %74 : memref<1x1x128xf32, #tpu.memory_space<vmem>> -> memref<128xf32, #tpu.memory_space<vmem>>
      %76 = tpu.memref_slice %arg6[%11] : memref<2x!tpu.dma_semaphore, #tpu.memory_space<semaphore_mem>> -> memref<1x!tpu.dma_semaphore, #tpu.memory_space<semaphore_mem>>
      %77 = tpu.memref_squeeze %76 : memref<1x!tpu.dma_semaphore, #tpu.memory_space<semaphore_mem>> -> memref<!tpu.dma_semaphore, #tpu.memory_space<semaphore_mem>>
      tpu.enqueue_dma source(%73 : memref<128xf32, #tpu.memory_space<any>>) target(%75 : memref<128xf32, #tpu.memory_space<vmem>>) target_semaphore(%77 : memref<!tpu.dma_semaphore, #tpu.memory_space<semaphore_mem>>)
      %c5_i32 = arith.constant 5 : i32
      %78 = arith.addi %32, %c5_i32 : i32
      %79 = arith.index_cast %78 : i32 to index
      %80 = memref.load %arg2[%79] : memref<64xi32, #tpu.memory_space<smem>>
      %c0_i32_30 = arith.constant 0 : i32
      %81 = tpu.memref_slice %arg3[%80, %c0_i32_30] : memref<64x128xf32, #tpu.memory_space<any>> -> memref<1x128xf32, #tpu.memory_space<any>>
      %82 = tpu.memref_squeeze %81 : memref<1x128xf32, #tpu.memory_space<any>> -> memref<128xf32, #tpu.memory_space<any>>
      %c0_i32_31 = arith.constant 0 : i32
      %83 = tpu.memref_slice %arg5[%11, %c5_i32, %c0_i32_31] : memref<2x8x128xf32, #tpu.memory_space<vmem>> -> memref<1x1x128xf32, #tpu.memory_space<vmem>>
      %84 = tpu.memref_squeeze %83 : memref<1x1x128xf32, #tpu.memory_space<vmem>> -> memref<128xf32, #tpu.memory_space<vmem>>
      %85 = tpu.memref_slice %arg6[%11] : memref<2x!tpu.dma_semaphore, #tpu.memory_space<semaphore_mem>> -> memref<1x!tpu.dma_semaphore, #tpu.memory_space<semaphore_mem>>
      %86 = tpu.memref_squeeze %85 : memref<1x!tpu.dma_semaphore, #tpu.memory_space<semaphore_mem>> -> memref<!tpu.dma_semaphore, #tpu.memory_space<semaphore_mem>>
      tpu.enqueue_dma source(%82 : memref<128xf32, #tpu.memory_space<any>>) target(%84 : memref<128xf32, #tpu.memory_space<vmem>>) target_semaphore(%86 : memref<!tpu.dma_semaphore, #tpu.memory_space<semaphore_mem>>)
      %c6_i32 = arith.constant 6 : i32
      %87 = arith.addi %32, %c6_i32 : i32
      %88 = arith.index_cast %87 : i32 to index
      %89 = memref.load %arg2[%88] : memref<64xi32, #tpu.memory_space<smem>>
      %c0_i32_32 = arith.constant 0 : i32
      %90 = tpu.memref_slice %arg3[%89, %c0_i32_32] : memref<64x128xf32, #tpu.memory_space<any>> -> memref<1x128xf32, #tpu.memory_space<any>>
      %91 = tpu.memref_squeeze %90 : memref<1x128xf32, #tpu.memory_space<any>> -> memref<128xf32, #tpu.memory_space<any>>
      %c0_i32_33 = arith.constant 0 : i32
      %92 = tpu.memref_slice %arg5[%11, %c6_i32, %c0_i32_33] : memref<2x8x128xf32, #tpu.memory_space<vmem>> -> memref<1x1x128xf32, #tpu.memory_space<vmem>>
      %93 = tpu.memref_squeeze %92 : memref<1x1x128xf32, #tpu.memory_space<vmem>> -> memref<128xf32, #tpu.memory_space<vmem>>
      %94 = tpu.memref_slice %arg6[%11] : memref<2x!tpu.dma_semaphore, #tpu.memory_space<semaphore_mem>> -> memref<1x!tpu.dma_semaphore, #tpu.memory_space<semaphore_mem>>
      %95 = tpu.memref_squeeze %94 : memref<1x!tpu.dma_semaphore, #tpu.memory_space<semaphore_mem>> -> memref<!tpu.dma_semaphore, #tpu.memory_space<semaphore_mem>>
      tpu.enqueue_dma source(%91 : memref<128xf32, #tpu.memory_space<any>>) target(%93 : memref<128xf32, #tpu.memory_space<vmem>>) target_semaphore(%95 : memref<!tpu.dma_semaphore, #tpu.memory_space<semaphore_mem>>)
      %c7_i32 = arith.constant 7 : i32
      %96 = arith.addi %32, %c7_i32 : i32
      %97 = arith.index_cast %96 : i32 to index
      %98 = memref.load %arg2[%97] : memref<64xi32, #tpu.memory_space<smem>>
      %c0_i32_34 = arith.constant 0 : i32
      %99 = tpu.memref_slice %arg3[%98, %c0_i32_34] : memref<64x128xf32, #tpu.memory_space<any>> -> memref<1x128xf32, #tpu.memory_space<any>>
      %100 = tpu.memref_squeeze %99 : memref<1x128xf32, #tpu.memory_space<any>> -> memref<128xf32, #tpu.memory_space<any>>
      %c0_i32_35 = arith.constant 0 : i32
      %101 = tpu.memref_slice %arg5[%11, %c7_i32, %c0_i32_35] : memref<2x8x128xf32, #tpu.memory_space<vmem>> -> memref<1x1x128xf32, #tpu.memory_space<vmem>>
      %102 = tpu.memref_squeeze %101 : memref<1x1x128xf32, #tpu.memory_space<vmem>> -> memref<128xf32, #tpu.memory_space<vmem>>
      %103 = tpu.memref_slice %arg6[%11] : memref<2x!tpu.dma_semaphore, #tpu.memory_space<semaphore_mem>> -> memref<1x!tpu.dma_semaphore, #tpu.memory_space<semaphore_mem>>
      %104 = tpu.memref_squeeze %103 : memref<1x!tpu.dma_semaphore, #tpu.memory_space<semaphore_mem>> -> memref<!tpu.dma_semaphore, #tpu.memory_space<semaphore_mem>>
      tpu.enqueue_dma source(%100 : memref<128xf32, #tpu.memory_space<any>>) target(%102 : memref<128xf32, #tpu.memory_space<vmem>>) target_semaphore(%104 : memref<!tpu.dma_semaphore, #tpu.memory_space<semaphore_mem>>)
      %c8_i32_36 = arith.constant 8 : i32
    } else {
    }
    %c1_i32_5 = arith.constant 1 : i32
    %15 = arith.addi %arg1, %c1_i32_5 : i32
    %c4_i32_6 = arith.constant 4 : i32
    %16 = arith.cmpi slt, %15, %c4_i32_6 : i32
    %17 = arith.extui %16 : i1 to i32
    %c0_i32_7 = arith.constant 0 : i32
    %18 = arith.cmpi ne, %17, %c0_i32_7 : i32
    scf.if %18 {
      %c1_i32_16 = arith.constant 1 : i32
      %32 = arith.addi %1, %c1_i32_16 : i32
      %c1_i32_17 = arith.constant 1 : i32
      %33 = arith.subi %c1_i32_17, %11 : i32
      %c8_i32 = arith.constant 8 : i32
      %34 = arith.muli %32, %c8_i32 : i32
      %c0_i32_18 = arith.constant 0 : i32
      %35 = arith.addi %34, %c0_i32_18 : i32
      %36 = arith.index_cast %35 : i32 to index
      %37 = memref.load %arg2[%36] : memref<64xi32, #tpu.memory_space<smem>>
      %c0_i32_19 = arith.constant 0 : i32
      %38 = tpu.memref_slice %arg3[%37, %c0_i32_19] : memref<64x128xf32, #tpu.memory_space<any>> -> memref<1x128xf32, #tpu.memory_space<any>>
      %39 = tpu.memref_squeeze %38 : memref<1x128xf32, #tpu.memory_space<any>> -> memref<128xf32, #tpu.memory_space<any>>
      %c0_i32_20 = arith.constant 0 : i32
      %40 = tpu.memref_slice %arg5[%33, %c0_i32_18, %c0_i32_20] : memref<2x8x128xf32, #tpu.memory_space<vmem>> -> memref<1x1x128xf32, #tpu.memory_space<vmem>>
      %41 = tpu.memref_squeeze %40 : memref<1x1x128xf32, #tpu.memory_space<vmem>> -> memref<128xf32, #tpu.memory_space<vmem>>
      %42 = tpu.memref_slice %arg6[%33] : memref<2x!tpu.dma_semaphore, #tpu.memory_space<semaphore_mem>> -> memref<1x!tpu.dma_semaphore, #tpu.memory_space<semaphore_mem>>
      %43 = tpu.memref_squeeze %42 : memref<1x!tpu.dma_semaphore, #tpu.memory_space<semaphore_mem>> -> memref<!tpu.dma_semaphore, #tpu.memory_space<semaphore_mem>>
      tpu.enqueue_dma source(%39 : memref<128xf32, #tpu.memory_space<any>>) target(%41 : memref<128xf32, #tpu.memory_space<vmem>>) target_semaphore(%43 : memref<!tpu.dma_semaphore, #tpu.memory_space<semaphore_mem>>)
      %c1_i32_21 = arith.constant 1 : i32
      %44 = arith.addi %34, %c1_i32_21 : i32
      %45 = arith.index_cast %44 : i32 to index
      %46 = memref.load %arg2[%45] : memref<64xi32, #tpu.memory_space<smem>>
      %c0_i32_22 = arith.constant 0 : i32
      %47 = tpu.memref_slice %arg3[%46, %c0_i32_22] : memref<64x128xf32, #tpu.memory_space<any>> -> memref<1x128xf32, #tpu.memory_space<any>>
      %48 = tpu.memref_squeeze %47 : memref<1x128xf32, #tpu.memory_space<any>> -> memref<128xf32, #tpu.memory_space<any>>
      %c0_i32_23 = arith.constant 0 : i32
      %49 = tpu.memref_slice %arg5[%33, %c1_i32_21, %c0_i32_23] : memref<2x8x128xf32, #tpu.memory_space<vmem>> -> memref<1x1x128xf32, #tpu.memory_space<vmem>>
      %50 = tpu.memref_squeeze %49 : memref<1x1x128xf32, #tpu.memory_space<vmem>> -> memref<128xf32, #tpu.memory_space<vmem>>
      %51 = tpu.memref_slice %arg6[%33] : memref<2x!tpu.dma_semaphore, #tpu.memory_space<semaphore_mem>> -> memref<1x!tpu.dma_semaphore, #tpu.memory_space<semaphore_mem>>
      %52 = tpu.memref_squeeze %51 : memref<1x!tpu.dma_semaphore, #tpu.memory_space<semaphore_mem>> -> memref<!tpu.dma_semaphore, #tpu.memory_space<semaphore_mem>>
      tpu.enqueue_dma source(%48 : memref<128xf32, #tpu.memory_space<any>>) target(%50 : memref<128xf32, #tpu.memory_space<vmem>>) target_semaphore(%52 : memref<!tpu.dma_semaphore, #tpu.memory_space<semaphore_mem>>)
      %c2_i32_24 = arith.constant 2 : i32
      %53 = arith.addi %34, %c2_i32_24 : i32
      %54 = arith.index_cast %53 : i32 to index
      %55 = memref.load %arg2[%54] : memref<64xi32, #tpu.memory_space<smem>>
      %c0_i32_25 = arith.constant 0 : i32
      %56 = tpu.memref_slice %arg3[%55, %c0_i32_25] : memref<64x128xf32, #tpu.memory_space<any>> -> memref<1x128xf32, #tpu.memory_space<any>>
      %57 = tpu.memref_squeeze %56 : memref<1x128xf32, #tpu.memory_space<any>> -> memref<128xf32, #tpu.memory_space<any>>
      %c0_i32_26 = arith.constant 0 : i32
      %58 = tpu.memref_slice %arg5[%33, %c2_i32_24, %c0_i32_26] : memref<2x8x128xf32, #tpu.memory_space<vmem>> -> memref<1x1x128xf32, #tpu.memory_space<vmem>>
      %59 = tpu.memref_squeeze %58 : memref<1x1x128xf32, #tpu.memory_space<vmem>> -> memref<128xf32, #tpu.memory_space<vmem>>
      %60 = tpu.memref_slice %arg6[%33] : memref<2x!tpu.dma_semaphore, #tpu.memory_space<semaphore_mem>> -> memref<1x!tpu.dma_semaphore, #tpu.memory_space<semaphore_mem>>
      %61 = tpu.memref_squeeze %60 : memref<1x!tpu.dma_semaphore, #tpu.memory_space<semaphore_mem>> -> memref<!tpu.dma_semaphore, #tpu.memory_space<semaphore_mem>>
      tpu.enqueue_dma source(%57 : memref<128xf32, #tpu.memory_space<any>>) target(%59 : memref<128xf32, #tpu.memory_space<vmem>>) target_semaphore(%61 : memref<!tpu.dma_semaphore, #tpu.memory_space<semaphore_mem>>)
      %c3_i32 = arith.constant 3 : i32
      %62 = arith.addi %34, %c3_i32 : i32
      %63 = arith.index_cast %62 : i32 to index
      %64 = memref.load %arg2[%63] : memref<64xi32, #tpu.memory_space<smem>>
      %c0_i32_27 = arith.constant 0 : i32
      %65 = tpu.memref_slice %arg3[%64, %c0_i32_27] : memref<64x128xf32, #tpu.memory_space<any>> -> memref<1x128xf32, #tpu.memory_space<any>>
      %66 = tpu.memref_squeeze %65 : memref<1x128xf32, #tpu.memory_space<any>> -> memref<128xf32, #tpu.memory_space<any>>
      %c0_i32_28 = arith.constant 0 : i32
      %67 = tpu.memref_slice %arg5[%33, %c3_i32, %c0_i32_28] : memref<2x8x128xf32, #tpu.memory_space<vmem>> -> memref<1x1x128xf32, #tpu.memory_space<vmem>>
      %68 = tpu.memref_squeeze %67 : memref<1x1x128xf32, #tpu.memory_space<vmem>> -> memref<128xf32, #tpu.memory_space<vmem>>
      %69 = tpu.memref_slice %arg6[%33] : memref<2x!tpu.dma_semaphore, #tpu.memory_space<semaphore_mem>> -> memref<1x!tpu.dma_semaphore, #tpu.memory_space<semaphore_mem>>
      %70 = tpu.memref_squeeze %69 : memref<1x!tpu.dma_semaphore, #tpu.memory_space<semaphore_mem>> -> memref<!tpu.dma_semaphore, #tpu.memory_space<semaphore_mem>>
      tpu.enqueue_dma source(%66 : memref<128xf32, #tpu.memory_space<any>>) target(%68 : memref<128xf32, #tpu.memory_space<vmem>>) target_semaphore(%70 : memref<!tpu.dma_semaphore, #tpu.memory_space<semaphore_mem>>)
      %c4_i32_29 = arith.constant 4 : i32
      %71 = arith.addi %34, %c4_i32_29 : i32
      %72 = arith.index_cast %71 : i32 to index
      %73 = memref.load %arg2[%72] : memref<64xi32, #tpu.memory_space<smem>>
      %c0_i32_30 = arith.constant 0 : i32
      %74 = tpu.memref_slice %arg3[%73, %c0_i32_30] : memref<64x128xf32, #tpu.memory_space<any>> -> memref<1x128xf32, #tpu.memory_space<any>>
      %75 = tpu.memref_squeeze %74 : memref<1x128xf32, #tpu.memory_space<any>> -> memref<128xf32, #tpu.memory_space<any>>
      %c0_i32_31 = arith.constant 0 : i32
      %76 = tpu.memref_slice %arg5[%33, %c4_i32_29, %c0_i32_31] : memref<2x8x128xf32, #tpu.memory_space<vmem>> -> memref<1x1x128xf32, #tpu.memory_space<vmem>>
      %77 = tpu.memref_squeeze %76 : memref<1x1x128xf32, #tpu.memory_space<vmem>> -> memref<128xf32, #tpu.memory_space<vmem>>
      %78 = tpu.memref_slice %arg6[%33] : memref<2x!tpu.dma_semaphore, #tpu.memory_space<semaphore_mem>> -> memref<1x!tpu.dma_semaphore, #tpu.memory_space<semaphore_mem>>
      %79 = tpu.memref_squeeze %78 : memref<1x!tpu.dma_semaphore, #tpu.memory_space<semaphore_mem>> -> memref<!tpu.dma_semaphore, #tpu.memory_space<semaphore_mem>>
      tpu.enqueue_dma source(%75 : memref<128xf32, #tpu.memory_space<any>>) target(%77 : memref<128xf32, #tpu.memory_space<vmem>>) target_semaphore(%79 : memref<!tpu.dma_semaphore, #tpu.memory_space<semaphore_mem>>)
      %c5_i32 = arith.constant 5 : i32
      %80 = arith.addi %34, %c5_i32 : i32
      %81 = arith.index_cast %80 : i32 to index
      %82 = memref.load %arg2[%81] : memref<64xi32, #tpu.memory_space<smem>>
      %c0_i32_32 = arith.constant 0 : i32
      %83 = tpu.memref_slice %arg3[%82, %c0_i32_32] : memref<64x128xf32, #tpu.memory_space<any>> -> memref<1x128xf32, #tpu.memory_space<any>>
      %84 = tpu.memref_squeeze %83 : memref<1x128xf32, #tpu.memory_space<any>> -> memref<128xf32, #tpu.memory_space<any>>
      %c0_i32_33 = arith.constant 0 : i32
      %85 = tpu.memref_slice %arg5[%33, %c5_i32, %c0_i32_33] : memref<2x8x128xf32, #tpu.memory_space<vmem>> -> memref<1x1x128xf32, #tpu.memory_space<vmem>>
      %86 = tpu.memref_squeeze %85 : memref<1x1x128xf32, #tpu.memory_space<vmem>> -> memref<128xf32, #tpu.memory_space<vmem>>
      %87 = tpu.memref_slice %arg6[%33] : memref<2x!tpu.dma_semaphore, #tpu.memory_space<semaphore_mem>> -> memref<1x!tpu.dma_semaphore, #tpu.memory_space<semaphore_mem>>
      %88 = tpu.memref_squeeze %87 : memref<1x!tpu.dma_semaphore, #tpu.memory_space<semaphore_mem>> -> memref<!tpu.dma_semaphore, #tpu.memory_space<semaphore_mem>>
      tpu.enqueue_dma source(%84 : memref<128xf32, #tpu.memory_space<any>>) target(%86 : memref<128xf32, #tpu.memory_space<vmem>>) target_semaphore(%88 : memref<!tpu.dma_semaphore, #tpu.memory_space<semaphore_mem>>)
      %c6_i32 = arith.constant 6 : i32
      %89 = arith.addi %34, %c6_i32 : i32
      %90 = arith.index_cast %89 : i32 to index
      %91 = memref.load %arg2[%90] : memref<64xi32, #tpu.memory_space<smem>>
      %c0_i32_34 = arith.constant 0 : i32
      %92 = tpu.memref_slice %arg3[%91, %c0_i32_34] : memref<64x128xf32, #tpu.memory_space<any>> -> memref<1x128xf32, #tpu.memory_space<any>>
      %93 = tpu.memref_squeeze %92 : memref<1x128xf32, #tpu.memory_space<any>> -> memref<128xf32, #tpu.memory_space<any>>
      %c0_i32_35 = arith.constant 0 : i32
      %94 = tpu.memref_slice %arg5[%33, %c6_i32, %c0_i32_35] : memref<2x8x128xf32, #tpu.memory_space<vmem>> -> memref<1x1x128xf32, #tpu.memory_space<vmem>>
      %95 = tpu.memref_squeeze %94 : memref<1x1x128xf32, #tpu.memory_space<vmem>> -> memref<128xf32, #tpu.memory_space<vmem>>
      %96 = tpu.memref_slice %arg6[%33] : memref<2x!tpu.dma_semaphore, #tpu.memory_space<semaphore_mem>> -> memref<1x!tpu.dma_semaphore, #tpu.memory_space<semaphore_mem>>
      %97 = tpu.memref_squeeze %96 : memref<1x!tpu.dma_semaphore, #tpu.memory_space<semaphore_mem>> -> memref<!tpu.dma_semaphore, #tpu.memory_space<semaphore_mem>>
      tpu.enqueue_dma source(%93 : memref<128xf32, #tpu.memory_space<any>>) target(%95 : memref<128xf32, #tpu.memory_space<vmem>>) target_semaphore(%97 : memref<!tpu.dma_semaphore, #tpu.memory_space<semaphore_mem>>)
      %c7_i32 = arith.constant 7 : i32
      %98 = arith.addi %34, %c7_i32 : i32
      %99 = arith.index_cast %98 : i32 to index
      %100 = memref.load %arg2[%99] : memref<64xi32, #tpu.memory_space<smem>>
      %c0_i32_36 = arith.constant 0 : i32
      %101 = tpu.memref_slice %arg3[%100, %c0_i32_36] : memref<64x128xf32, #tpu.memory_space<any>> -> memref<1x128xf32, #tpu.memory_space<any>>
      %102 = tpu.memref_squeeze %101 : memref<1x128xf32, #tpu.memory_space<any>> -> memref<128xf32, #tpu.memory_space<any>>
      %c0_i32_37 = arith.constant 0 : i32
      %103 = tpu.memref_slice %arg5[%33, %c7_i32, %c0_i32_37] : memref<2x8x128xf32, #tpu.memory_space<vmem>> -> memref<1x1x128xf32, #tpu.memory_space<vmem>>
      %104 = tpu.memref_squeeze %103 : memref<1x1x128xf32, #tpu.memory_space<vmem>> -> memref<128xf32, #tpu.memory_space<vmem>>
      %105 = tpu.memref_slice %arg6[%33] : memref<2x!tpu.dma_semaphore, #tpu.memory_space<semaphore_mem>> -> memref<1x!tpu.dma_semaphore, #tpu.memory_space<semaphore_mem>>
      %106 = tpu.memref_squeeze %105 : memref<1x!tpu.dma_semaphore, #tpu.memory_space<semaphore_mem>> -> memref<!tpu.dma_semaphore, #tpu.memory_space<semaphore_mem>>
      tpu.enqueue_dma source(%102 : memref<128xf32, #tpu.memory_space<any>>) target(%104 : memref<128xf32, #tpu.memory_space<vmem>>) target_semaphore(%106 : memref<!tpu.dma_semaphore, #tpu.memory_space<semaphore_mem>>)
      %c8_i32_38 = arith.constant 8 : i32
    } else {
    }
    %c1_i32_8 = arith.constant 1 : i32
    %19 = arith.subi %c1_i32_8, %11 : i32
    %c0_i32_9 = arith.constant 0 : i32
    %c0_i32_10 = arith.constant 0 : i32
    %20 = tpu.memref_slice %arg5[%19, %c0_i32_9, %c0_i32_10] : memref<2x8x128xf32, #tpu.memory_space<vmem>> -> memref<1x8x128xf32, #tpu.memory_space<vmem>>
    %21 = tpu.memref_squeeze %20 : memref<1x8x128xf32, #tpu.memory_space<vmem>> -> memref<8x128xf32, #tpu.memory_space<vmem>>
    %c0_i32_11 = arith.constant 0 : i32
    %c0_i32_12 = arith.constant 0 : i32
    %22 = tpu.memref_slice %arg5[%11, %c0_i32_11, %c0_i32_12] : memref<2x8x128xf32, #tpu.memory_space<vmem>> -> memref<1x8x128xf32, #tpu.memory_space<vmem>>
    %23 = tpu.memref_squeeze %22 : memref<1x8x128xf32, #tpu.memory_space<vmem>> -> memref<8x128xf32, #tpu.memory_space<vmem>>
    %24 = tpu.memref_slice %arg6[%11] : memref<2x!tpu.dma_semaphore, #tpu.memory_space<semaphore_mem>> -> memref<1x!tpu.dma_semaphore, #tpu.memory_space<semaphore_mem>>
    %25 = tpu.memref_squeeze %24 : memref<1x!tpu.dma_semaphore, #tpu.memory_space<semaphore_mem>> -> memref<!tpu.dma_semaphore, #tpu.memory_space<semaphore_mem>>
    tpu.wait_dma2 semaphore(%25 : memref<!tpu.dma_semaphore, #tpu.memory_space<semaphore_mem>>) src(%21 : memref<8x128xf32, #tpu.memory_space<vmem>>) dst(%23 : memref<8x128xf32, #tpu.memory_space<vmem>>)
    %26 = arith.index_cast %11 : i32 to index
    %c0 = arith.constant 0 : index
    %c0_13 = arith.constant 0 : index
    %27 = vector.load %arg5[%26, %c0, %c0_13] : memref<2x8x128xf32, #tpu.memory_space<vmem>>, vector<1x8x128xf32>
    %28 = vector.shape_cast %27 : vector<1x8x128xf32> to vector<8x128xf32>
    %cst = arith.constant 11.3137083 : f32
    %29 = vector.broadcast %cst : f32 to vector<8x128xf32>
    %30 = arith.mulf %28, %29 : vector<8x128xf32>
    %c0_14 = arith.constant 0 : index
    %c0_15 = arith.constant 0 : index
    %31 = vector.load %arg4[%c0_14, %c0_15] : memref<8x128xf32, #tpu.memory_space<vmem>>, vector<8x128xf32>
    tpu.vector_store %arg4[%c0_14, %c0_15], %30 {strides = array<i32>} : memref<8x128xf32, #tpu.memory_space<vmem>>, vector<8x128xf32>,
    return
  }
  func.func @transform_1(%arg0: i32, %arg1: i32, %arg2: memref<64xi32, #tpu.memory_space<smem>>) -> (i32, i32) {
    %c4_i32 = arith.constant 4 : i32
    %0 = arith.muli %arg0, %c4_i32 : i32
    %1 = arith.addi %0, %arg1 : i32
    %c0_i32 = arith.constant 0 : i32
    %c0_i32_0 = arith.constant 0 : i32
    return %1, %c0_i32 : i32, i32
  }
}

</mosaic_0001>

<llo_original>
// kernel: tpu_custom_call.1
$region0: #{tpu_custom_call.1}
  #allocation0 [shape = 'u32[]', space=smem, size = 0x4, offset = 0x4, fixed_abs, tag = 'smem constant byte address 0x4 - core index']
  #allocation1 [shape = 'u32[72,128]{1,0:T(1,128)}', space=vmem, size = 0x9000, scoped, tag = 'internal scratch']
  #allocation2 [shape = 'f32[2,8,128]{2,1,0:T(8,128)}', space=vmem, size = 0x2000, scoped, tag = 'scratch operand']
  #allocation3 [shape = 's32[2]{0}', space=sflag, size = 0x8, scoped, tag = 'scratch operand']
  #allocation4 [shape = 's32[1]{0}', space=sflag, size = 0x4, scoped, tag = 'scoped memory for tpu_custom_call.1']
  #allocation5 [shape = 'u8[512]{0}', space=smem, size = 0x200, scoped, tag = 'prefetched SMEM operand 0']
  #allocation8 [shape = 's32[]', space=sflag, size = 0x4, offset = 0, fixed_abs, tag = 'sflag constant byte address 0x0 - dummy sync flag']
  #allocation9 [shape = 's32[]', space=sflag, size = 0x4, offset = 0, fixed_abs, tag = 'sflag constant byte address 0x0 - dummy sync flag']
  #allocation10 [shape = 'u32[]', space=smem, size = 0x4, offset = 0x44, fixed_abs, tag = 'smem constant byte address 0x44 - assertion arg 0']
  #allocation11 [shape = 'u32[]', space=smem, size = 0x4, offset = 0x48, fixed_abs, tag = 'smem constant byte address 0x48 - assertion arg 1']
  #allocation12 [shape = 's32[]', space=sflag, size = 0x4, offset = 0, fixed_abs, tag = 'sflag constant byte address 0x0 - dummy sync flag']
  #allocation13 [shape = 's32[]', space=sflag, size = 0x4, offset = 0, fixed_abs, tag = 'sflag constant byte address 0x0 - dummy sync flag']
  #allocation14 [shape = 's32[]', space=sflag, size = 0x4, offset = 0, fixed_abs, tag = 'sflag constant byte address 0x0 - dummy sync flag']
  #allocation15 [shape = 's32[]', space=sflag, size = 0x4, offset = 0, fixed_abs, tag = 'sflag constant byte address 0x0 - dummy sync flag']
  #allocation16 [shape = 's32[]', space=sflag, size = 0x4, offset = 0, fixed_abs, tag = 'sflag constant byte address 0x0 - dummy sync flag']
  #allocation17 [shape = 's32[]', space=sflag, size = 0x4, offset = 0, fixed_abs, tag = 'sflag constant byte address 0x0 - dummy sync flag']
  #allocation18 [shape = 's32[]', space=sflag, size = 0x4, offset = 0, fixed_abs, tag = 'sflag constant byte address 0x0 - dummy sync flag']
  #allocation19 [shape = 's32[]', space=sflag, size = 0x4, offset = 0, fixed_abs, tag = 'sflag constant byte address 0x0 - dummy sync flag']
  #allocation20 [shape = 's32[]', space=sflag, size = 0x4, offset = 0, fixed_abs, tag = 'sflag constant byte address 0x0 - dummy sync flag']
  #allocation21 [shape = 's32[]', space=sflag, size = 0x4, offset = 0, fixed_abs, tag = 'sflag constant byte address 0x0 - dummy sync flag']
  #allocation22 [shape = 's32[]', space=sflag, size = 0x4, offset = 0, fixed_abs, tag = 'sflag constant byte address 0x0 - dummy sync flag']
  #allocation23 [shape = 's32[]', space=sflag, size = 0x4, offset = 0, fixed_abs, tag = 'sflag constant byte address 0x0 - dummy sync flag']
  #allocation24 [shape = 's32[]', space=sflag, size = 0x4, offset = 0, fixed_abs, tag = 'sflag constant byte address 0x0 - dummy sync flag']
  #allocation25 [shape = 's32[]', space=sflag, size = 0x4, offset = 0, fixed_abs, tag = 'sflag constant byte address 0x0 - dummy sync flag']
  #allocation26 [shape = 's32[]', space=sflag, size = 0x4, offset = 0, fixed_abs, tag = 'sflag constant byte address 0x0 - dummy sync flag']
  #allocation27 [shape = 's32[]', space=sflag, size = 0x4, offset = 0, fixed_abs, tag = 'sflag constant byte address 0x0 - dummy sync flag']
  #allocation28 [shape = 's32[]', space=sflag, size = 0x4, offset = 0, fixed_abs, tag = 'sflag constant byte address 0x0 - dummy sync flag']
  #allocation29 [shape = 's32[]', space=sflag, size = 0x4, offset = 0, fixed_abs, tag = 'sflag constant byte address 0x0 - dummy sync flag']
  #allocation30 [shape = 's32[]', space=sflag, size = 0x4, offset = 0, fixed_abs, tag = 'sflag constant byte address 0x0 - dummy sync flag']
  #allocation31 [shape = 's32[]', space=sflag, size = 0x4, offset = 0, fixed_abs, tag = 'sflag constant byte address 0x0 - dummy sync flag']
  #allocation32 [shape = 's32[]', space=sflag, size = 0x4, offset = 0, fixed_abs, tag = 'sflag constant byte address 0x0 - dummy sync flag']
  #allocation33 [shape = 's32[]', space=sflag, size = 0x4, offset = 0, fixed_abs, tag = 'sflag constant byte address 0x0 - dummy sync flag']
  #allocation34 [shape = 's32[]', space=sflag, size = 0x4, offset = 0, fixed_abs, tag = 'sflag constant byte address 0x0 - dummy sync flag']
  #allocation35 [shape = 's32[]', space=sflag, size = 0x4, offset = 0, fixed_abs, tag = 'sflag constant byte address 0x0 - dummy sync flag']
  #allocation36 [shape = 's32[]', space=sflag, size = 0x4, offset = 0, fixed_abs, tag = 'sflag constant byte address 0x0 - dummy sync flag']
  #allocation37 [shape = 's32[]', space=sflag, size = 0x4, offset = 0, fixed_abs, tag = 'sflag constant byte address 0x0 - dummy sync flag']
  #allocation38 [shape = 's32[]', space=sflag, size = 0x4, offset = 0, fixed_abs, tag = 'sflag constant byte address 0x0 - dummy sync flag']
  #allocation39 [shape = 's32[]', space=sflag, size = 0x4, offset = 0, fixed_abs, tag = 'sflag constant byte address 0x0 - dummy sync flag']
  #allocation40 [shape = 's32[]', space=sflag, size = 0x4, offset = 0, fixed_abs, tag = 'sflag constant byte address 0x0 - dummy sync flag']
  #allocation41 [shape = 's32[]', space=sflag, size = 0x4, offset = 0, fixed_abs, tag = 'sflag constant byte address 0x0 - dummy sync flag']
  %s0 = inlined_call_operand.hbm [shape: s32[64], index: 0, kind: input, shape index: {}]
  %s1 = inlined_call_operand.hbm [shape: f32[64,128], index: 1, kind: input, shape index: {}]
  %s2 = inlined_call_operand.hbm [shape: f32[64,128], index: 2, kind: output, shape index: {}]
  %s3 = sld [smem:[#allocation0]]
  $region97: #{tpu_custom_call.1} parent=0
    _
  %s5 = ssub.s32 1, %s3
  %s6 = scalar_select 0, %s5, %s3
  %s8 = sshll.u32 %s0, 4
  %s9 = int_to_ptr.hbm [resolvable:$true] %s8
  %11 = dma.hbm_to_smem %s9, 16, [#allocation5], [#allocation4]
  %13 = dma.done [#allocation4], 16
  %14 = sfence
  $region1: #{tpu_custom_call.1} parent=0
    #allocation6 [shape = 'u8[8192]{0}', space=vmem, size = 0x2000, scoped, tag = 'output window, operand 0']
    #allocation7 [shape = 's32[2]{0}', space=sflag, size = 0x8, scoped, tag = 'scoped memory for tpu_custom_call.1']
    %15 = vsyncpa [#allocation7], 0
    %s16 = scalar_lea.sflag [#allocation7], 1
    %17 = vsyncpa %s16, 0
    loop: start=0, step=1, limit=9
    $region2: #{tpu_custom_call.1} parent=1 // loop_pre_header
      _
    $region3: #{tpu_custom_call.1} parent=1 // loop_header
      %s19 = sphi 0, %s23
      %p20 = scmp.ge.s32.totalorder %s19, 9
      %s25 = sphi 0, %s35
      %s26 = sphi 0, %s31
      %s27 = sphi 0, %s25
      %s28 = sphi 0, %s26
      %s42 = sphi 0, %s44
      %s45 = sphi 0, %s42
      %s55 = sphi 0, %s45
    $region4: #{tpu_custom_call.1} parent=1 // loop_header_branch
      %22 = sbr.rel (%p20) target = $region8
    $region5: #{tpu_custom_call.1} parent=1 // loop_body
      %s24 = ssub.s32 %s19, 1
      %s29 = sadd.s32 1, %s26
      %p30 = scmp.ge.s32.totalorder %s29, 4
      %s31 = scalar_select %p30, 0, %s29
      %s32 = sadd.s32 1, %s25
      %s33 = scalar_select %p30, %s32, %s25
      %p34 = scmp.ge.s32.totalorder %s33, 2
      %s35 = scalar_select %p34, 0, %s33
      %s36 = smul.u32 %s25, 4
      %s37 = sadd.s32 %s36, %s26
      %s38 = smul.u32 %s35, 4
      %s39 = sadd.s32 %s38, %s31
      %s40 = ssub.s32 %s37, %s39
      %p41 = scmp.eq.s32.totalorder %s40, 0
      %s43 = sadd.s32 %s42, 1
      %s44 = scalar_select %p41, %s42, %s43
      %p46 = pneg %p41
      %p47 = scmp.eq.s32.totalorder %s19, 7
      %p48 = por %p46, %p47
      %p49 = scmp.ne.s32.totalorder %s42, %s45
      %p50 = scmp.eq.s32.totalorder %s19, 0
      %p51 = por %p49, %p50
      %p52 = scmp.ne.s32.totalorder %s42, %s45
      %p53 = scmp.eq.s32.totalorder %s24, 7
      %p54 = por %p52, %p53
      %p56 = scmp.ne.s32.totalorder %s45, %s55
      %p57 = scmp.eq.s32.totalorder %s24, 0
      %p58 = por %p56, %p57
      %p59 = scmp.lt.s32.totalorder %s19, 8
      // Predicated region
      $region9: #{tpu_custom_call.1} parent=5 // pred_check
        %p60 = pneg %p59
      $region10: #{tpu_custom_call.1} parent=5 // pred_check_branch
        %62 = sbr.rel (%p60) target = $region12
      $region11: #{tpu_custom_call.1} parent=5 // pred_region
        %p63 = pneg %p51
        %p64 = pneg %p48
        %s65 = sand.u32 %s42, 1
        %s66 = scalar_lea.sflag [#allocation7], %s65
        %s67 = sand.u32 %s42, 1
        %s68 = smul.addr %s67, 8
        %s69 = scalar_lea.vmem [#allocation6], %s68
        %s70 = smul.u32 %s25, 4
        %s71 = sadd.s32 %s70, %s26
        %s72 = smul.u32 %s25, 4
        %s73 = sadd.s32 %s72, %s26
        %p74 = scmp.lt.s32.totalorder %s26, 0
        %s75 = ssub.s32 0, %s26
        %s76 = scalar_select %p74, %s75, %s26
        %s77 = sand.u32 %s76, 1
        %s78 = ssub.s32 0, %s77
        %s79 = scalar_select %p74, %s78, %s77
        %p80 = scmp.ne.s32.totalorder %s79, 0
        %p81 = scmp.lt.s32.totalorder %s79, 0
        %p82 = pnand %p81, %p80
        %p83 = pneg %p82
        %s84 = sadd.s32 %s79, 2
        %s85 = scalar_select %p83, %s84, %s79
        %p86 = scmp.eq.s32.totalorder %s26, 0
        // Predicated region
        $region13: #{tpu_custom_call.1} parent=11 // pred_check
          %p87 = pneg %p86
        $region14: #{tpu_custom_call.1} parent=11 // pred_check_branch
          %89 = sbr.rel (%p87) target = $region16
        $region15: #{tpu_custom_call.1} parent=11 // pred_region
          %s90 = smul.u32 %s73, 8
          %s91 = sld [smem:[#allocation5 + %s90]]
          %s92 = scalar_lea.hbm %s1, %s91
          %s93 = smul.u32 %s85, 8
          %s94 = scalar_lea.vmem [#allocation2], %s93
          %s95 = scalar_lea.sflag [#allocation3], %s85
          // Predicated region
          $region17: #{tpu_custom_call.1} parent=15 // pred_check
            _
          $region18: #{tpu_custom_call.1} parent=15 // pred_check_branch
            %97 = sbr.rel target = $region20
          $region19: #{tpu_custom_call.1} parent=15 // pred_region
            %98 = sst [smem:[#allocation10]] [#allocation9]
            %99 = sst [smem:[#allocation11]] [#allocation8]
          $region20: #{tpu_custom_call.1} parent=15 // pred_fallthru
            _
          %101 = shalt.err (0)
          %s103 = sshll.u32 %s92, 4
          %s104 = int_to_ptr.hbm [resolvable:$true] %s103
          %s105 = sshll.u32 %s94, 4
          %s106 = int_to_ptr.vmem [resolvable:$true] %s105
          %108 = dma.hbm_to_vmem [thread:$0]  %s104, 16, %s106, %s95
          %s109 = sadd.s32 %s90, 1
          %s110 = sld [smem:[#allocation5 + %s109]]
          %s111 = scalar_lea.hbm %s1, %s110
          %s112 = sadd.s32 1, %s93
          %s113 = scalar_lea.vmem [#allocation2], %s112
          // Predicated region
          $region21: #{tpu_custom_call.1} parent=15 // pred_check
            _
          $region22: #{tpu_custom_call.1} parent=15 // pred_check_branch
            %115 = sbr.rel target = $region24
          $region23: #{tpu_custom_call.1} parent=15 // pred_region
            %116 = sst [smem:[#allocation10]] [#allocation13]
            %117 = sst [smem:[#allocation11]] [#allocation12]
          $region24: #{tpu_custom_call.1} parent=15 // pred_fallthru
            _
          %119 = shalt.err (0)
          %s121 = sshll.u32 %s111, 4
          %s122 = int_to_ptr.hbm [resolvable:$true] %s121
          %s123 = sshll.u32 %s113, 4
          %s124 = int_to_ptr.vmem [resolvable:$true] %s123
          %126 = dma.hbm_to_vmem [thread:$0]  %s122, 16, %s124, %s95
          %s127 = sadd.s32 %s90, 2
          %s128 = sld [smem:[#allocation5 + %s127]]
          %s129 = scalar_lea.hbm %s1, %s128
          %s130 = sadd.s32 2, %s93
          %s131 = scalar_lea.vmem [#allocation2], %s130
          // Predicated region
          $region25: #{tpu_custom_call.1} parent=15 // pred_check
            _
          $region26: #{tpu_custom_call.1} parent=15 // pred_check_branch
            %133 = sbr.rel target = $region28
          $region27: #{tpu_custom_call.1} parent=15 // pred_region
            %134 = sst [smem:[#allocation10]] [#allocation15]
            %135 = sst [smem:[#allocation11]] [#allocation14]
          $region28: #{tpu_custom_call.1} parent=15 // pred_fallthru
            _
          %137 = shalt.err (0)
          %s139 = sshll.u32 %s129, 4
          %s140 = int_to_ptr.hbm [resolvable:$true] %s139
          %s141 = sshll.u32 %s131, 4
          %s142 = int_to_ptr.vmem [resolvable:$true] %s141
          %144 = dma.hbm_to_vmem [thread:$0]  %s140, 16, %s142, %s95
          %s145 = sadd.s32 %s90, 3
          %s146 = sld [smem:[#allocation5 + %s145]]
          %s147 = scalar_lea.hbm %s1, %s146
          %s148 = sadd.s32 3, %s93
          %s149 = scalar_lea.vmem [#allocation2], %s148
          // Predicated region
          $region29: #{tpu_custom_call.1} parent=15 // pred_check
            _
          $region30: #{tpu_custom_call.1} parent=15 // pred_check_branch
            %151 = sbr.rel target = $region32
          $region31: #{tpu_custom_call.1} parent=15 // pred_region
            %152 = sst [smem:[#allocation10]] [#allocation17]
            %153 = sst [smem:[#allocation11]] [#allocation16]
          $region32: #{tpu_custom_call.1} parent=15 // pred_fallthru
            _
          %155 = shalt.err (0)
          %s157 = sshll.u32 %s147, 4
          %s158 = int_to_ptr.hbm [resolvable:$true] %s157
          %s159 = sshll.u32 %s149, 4
          %s160 = int_to_ptr.vmem [resolvable:$true] %s159
          %162 = dma.hbm_to_vmem [thread:$0]  %s158, 16, %s160, %s95
          %s163 = sadd.s32 %s90, 4
          %s164 = sld [smem:[#allocation5 + %s163]]
          %s165 = scalar_lea.hbm %s1, %s164
          %s166 = sadd.s32 4, %s93
          %s167 = scalar_lea.vmem [#allocation2], %s166
          // Predicated region
          $region33: #{tpu_custom_call.1} parent=15 // pred_check
            _
          $region34: #{tpu_custom_call.1} parent=15 // pred_check_branch
            %169 = sbr.rel target = $region36
          $region35: #{tpu_custom_call.1} parent=15 // pred_region
            %170 = sst [smem:[#allocation10]] [#allocation19]
            %171 = sst [smem:[#allocation11]] [#allocation18]
          $region36: #{tpu_custom_call.1} parent=15 // pred_fallthru
            _
          %173 = shalt.err (0)
          %s175 = sshll.u32 %s165, 4
          %s176 = int_to_ptr.hbm [resolvable:$true] %s175
          %s177 = sshll.u32 %s167, 4
          %s178 = int_to_ptr.vmem [resolvable:$true] %s177
          %180 = dma.hbm_to_vmem [thread:$0]  %s176, 16, %s178, %s95
          %s181 = sadd.s32 %s90, 5
          %s182 = sld [smem:[#allocation5 + %s181]]
          %s183 = scalar_lea.hbm %s1, %s182
          %s184 = sadd.s32 5, %s93
          %s185 = scalar_lea.vmem [#allocation2], %s184
          // Predicated region
          $region37: #{tpu_custom_call.1} parent=15 // pred_check
            _
          $region38: #{tpu_custom_call.1} parent=15 // pred_check_branch
            %187 = sbr.rel target = $region40
          $region39: #{tpu_custom_call.1} parent=15 // pred_region
            %188 = sst [smem:[#allocation10]] [#allocation21]
            %189 = sst [smem:[#allocation11]] [#allocation20]
          $region40: #{tpu_custom_call.1} parent=15 // pred_fallthru
            _
          %191 = shalt.err (0)
          %s193 = sshll.u32 %s183, 4
          %s194 = int_to_ptr.hbm [resolvable:$true] %s193
          %s195 = sshll.u32 %s185, 4
          %s196 = int_to_ptr.vmem [resolvable:$true] %s195
          %198 = dma.hbm_to_vmem [thread:$0]  %s194, 16, %s196, %s95
          %s199 = sadd.s32 %s90, 6
          %s200 = sld [smem:[#allocation5 + %s199]]
          %s201 = scalar_lea.hbm %s1, %s200
          %s202 = sadd.s32 6, %s93
          %s203 = scalar_lea.vmem [#allocation2], %s202
          // Predicated region
          $region41: #{tpu_custom_call.1} parent=15 // pred_check
            _
          $region42: #{tpu_custom_call.1} parent=15 // pred_check_branch
            %205 = sbr.rel target = $region44
          $region43: #{tpu_custom_call.1} parent=15 // pred_region
            %206 = sst [smem:[#allocation10]] [#allocation23]
            %207 = sst [smem:[#allocation11]] [#allocation22]
          $region44: #{tpu_custom_call.1} parent=15 // pred_fallthru
            _
          %209 = shalt.err (0)
          %s211 = sshll.u32 %s201, 4
          %s212 = int_to_ptr.hbm [resolvable:$true] %s211
          %s213 = sshll.u32 %s203, 4
          %s214 = int_to_ptr.vmem [resolvable:$true] %s213
          %216 = dma.hbm_to_vmem [thread:$0]  %s212, 16, %s214, %s95
          %s217 = sadd.s32 %s90, 7
          %s218 = sld [smem:[#allocation5 + %s217]]
          %s219 = scalar_lea.hbm %s1, %s218
          %s220 = sadd.s32 7, %s93
          %s221 = scalar_lea.vmem [#allocation2], %s220
          // Predicated region
          $region45: #{tpu_custom_call.1} parent=15 // pred_check
            _
          $region46: #{tpu_custom_call.1} parent=15 // pred_check_branch
            %223 = sbr.rel target = $region48
          $region47: #{tpu_custom_call.1} parent=15 // pred_region
            %224 = sst [smem:[#allocation10]] [#allocation25]
            %225 = sst [smem:[#allocation11]] [#allocation24]
          $region48: #{tpu_custom_call.1} parent=15 // pred_fallthru
            _
          %227 = shalt.err (0)
          %s229 = sshll.u32 %s219, 4
          %s230 = int_to_ptr.hbm [resolvable:$true] %s229
          %s231 = sshll.u32 %s221, 4
          %s232 = int_to_ptr.vmem [resolvable:$true] %s231
          %234 = dma.hbm_to_vmem [thread:$0]  %s230, 16, %s232, %s95
        $region16: #{tpu_custom_call.1} parent=11 // pred_fallthru
          _
        %s235 = sadd.s32 %s26, 1
        %p236 = scmp.lt.s32.totalorder %s235, 4
        // Predicated region
        $region49: #{tpu_custom_call.1} parent=11 // pred_check
          %p237 = pneg %p236
        $region50: #{tpu_custom_call.1} parent=11 // pred_check_branch
          %239 = sbr.rel (%p237) target = $region52
        $region51: #{tpu_custom_call.1} parent=11 // pred_region
          %s240 = sadd.s32 %s73, 1
          %s241 = ssub.s32 1, %s85
          %s242 = smul.u32 %s240, 8
          %s243 = sld [smem:[#allocation5 + %s242]]
          %s244 = scalar_lea.hbm %s1, %s243
          %s245 = smul.u32 %s241, 8
          %s246 = scalar_lea.vmem [#allocation2], %s245
          %s247 = scalar_lea.sflag [#allocation3], %s241
          // Predicated region
          $region53: #{tpu_custom_call.1} parent=51 // pred_check
            _
          $region54: #{tpu_custom_call.1} parent=51 // pred_check_branch
            %249 = sbr.rel target = $region56
          $region55: #{tpu_custom_call.1} parent=51 // pred_region
            %250 = sst [smem:[#allocation10]] [#allocation27]
            %251 = sst [smem:[#allocation11]] [#allocation26]
          $region56: #{tpu_custom_call.1} parent=51 // pred_fallthru
            _
          %253 = shalt.err (0)
          %s255 = sshll.u32 %s244, 4
          %s256 = int_to_ptr.hbm [resolvable:$true] %s255
          %s257 = sshll.u32 %s246, 4
          %s258 = int_to_ptr.vmem [resolvable:$true] %s257
          %260 = dma.hbm_to_vmem [thread:$0]  %s256, 16, %s258, %s247
          %s261 = sadd.s32 %s242, 1
          %s262 = sld [smem:[#allocation5 + %s261]]
          %s263 = scalar_lea.hbm %s1, %s262
          %s264 = sadd.s32 1, %s245
          %s265 = scalar_lea.vmem [#allocation2], %s264
          // Predicated region
          $region57: #{tpu_custom_call.1} parent=51 // pred_check
            _
          $region58: #{tpu_custom_call.1} parent=51 // pred_check_branch
            %267 = sbr.rel target = $region60
          $region59: #{tpu_custom_call.1} parent=51 // pred_region
            %268 = sst [smem:[#allocation10]] [#allocation29]
            %269 = sst [smem:[#allocation11]] [#allocation28]
          $region60: #{tpu_custom_call.1} parent=51 // pred_fallthru
            _
          %271 = shalt.err (0)
          %s273 = sshll.u32 %s263, 4
          %s274 = int_to_ptr.hbm [resolvable:$true] %s273
          %s275 = sshll.u32 %s265, 4
          %s276 = int_to_ptr.vmem [resolvable:$true] %s275
          %278 = dma.hbm_to_vmem [thread:$0]  %s274, 16, %s276, %s247
          %s279 = sadd.s32 %s242, 2
          %s280 = sld [smem:[#allocation5 + %s279]]
          %s281 = scalar_lea.hbm %s1, %s280
          %s282 = sadd.s32 2, %s245
          %s283 = scalar_lea.vmem [#allocation2], %s282
          // Predicated region
          $region61: #{tpu_custom_call.1} parent=51 // pred_check
            _
          $region62: #{tpu_custom_call.1} parent=51 // pred_check_branch
            %285 = sbr.rel target = $region64
          $region63: #{tpu_custom_call.1} parent=51 // pred_region
            %286 = sst [smem:[#allocation10]] [#allocation31]
            %287 = sst [smem:[#allocation11]] [#allocation30]
          $region64: #{tpu_custom_call.1} parent=51 // pred_fallthru
            _
          %289 = shalt.err (0)
          %s291 = sshll.u32 %s281, 4
          %s292 = int_to_ptr.hbm [resolvable:$true] %s291
          %s293 = sshll.u32 %s283, 4
          %s294 = int_to_ptr.vmem [resolvable:$true] %s293
          %296 = dma.hbm_to_vmem [thread:$0]  %s292, 16, %s294, %s247
          %s297 = sadd.s32 %s242, 3
          %s298 = sld [smem:[#allocation5 + %s297]]
          %s299 = scalar_lea.hbm %s1, %s298
          %s300 = sadd.s32 3, %s245
          %s301 = scalar_lea.vmem [#allocation2], %s300
          // Predicated region
          $region65: #{tpu_custom_call.1} parent=51 // pred_check
            _
          $region66: #{tpu_custom_call.1} parent=51 // pred_check_branch
            %303 = sbr.rel target = $region68
          $region67: #{tpu_custom_call.1} parent=51 // pred_region
            %304 = sst [smem:[#allocation10]] [#allocation33]
            %305 = sst [smem:[#allocation11]] [#allocation32]
          $region68: #{tpu_custom_call.1} parent=51 // pred_fallthru
            _
          %307 = shalt.err (0)
          %s309 = sshll.u32 %s299, 4
          %s310 = int_to_ptr.hbm [resolvable:$true] %s309
          %s311 = sshll.u32 %s301, 4
          %s312 = int_to_ptr.vmem [resolvable:$true] %s311
          %314 = dma.hbm_to_vmem [thread:$0]  %s310, 16, %s312, %s247
          %s315 = sadd.s32 %s242, 4
          %s316 = sld [smem:[#allocation5 + %s315]]
          %s317 = scalar_lea.hbm %s1, %s316
          %s318 = sadd.s32 4, %s245
          %s319 = scalar_lea.vmem [#allocation2], %s318
          // Predicated region
          $region69: #{tpu_custom_call.1} parent=51 // pred_check
            _
          $region70: #{tpu_custom_call.1} parent=51 // pred_check_branch
            %321 = sbr.rel target = $region72
          $region71: #{tpu_custom_call.1} parent=51 // pred_region
            %322 = sst [smem:[#allocation10]] [#allocation35]
            %323 = sst [smem:[#allocation11]] [#allocation34]
          $region72: #{tpu_custom_call.1} parent=51 // pred_fallthru
            _
          %325 = shalt.err (0)
          %s327 = sshll.u32 %s317, 4
          %s328 = int_to_ptr.hbm [resolvable:$true] %s327
          %s329 = sshll.u32 %s319, 4
          %s330 = int_to_ptr.vmem [resolvable:$true] %s329
          %332 = dma.hbm_to_vmem [thread:$0]  %s328, 16, %s330, %s247
          %s333 = sadd.s32 %s242, 5
          %s334 = sld [smem:[#allocation5 + %s333]]
          %s335 = scalar_lea.hbm %s1, %s334
          %s336 = sadd.s32 5, %s245
          %s337 = scalar_lea.vmem [#allocation2], %s336
          // Predicated region
          $region73: #{tpu_custom_call.1} parent=51 // pred_check
            _
          $region74: #{tpu_custom_call.1} parent=51 // pred_check_branch
            %339 = sbr.rel target = $region76
          $region75: #{tpu_custom_call.1} parent=51 // pred_region
            %340 = sst [smem:[#allocation10]] [#allocation37]
            %341 = sst [smem:[#allocation11]] [#allocation36]
          $region76: #{tpu_custom_call.1} parent=51 // pred_fallthru
            _
          %343 = shalt.err (0)
          %s345 = sshll.u32 %s335, 4
          %s346 = int_to_ptr.hbm [resolvable:$true] %s345
          %s347 = sshll.u32 %s337, 4
          %s348 = int_to_ptr.vmem [resolvable:$true] %s347
          %350 = dma.hbm_to_vmem [thread:$0]  %s346, 16, %s348, %s247
          %s351 = sadd.s32 %s242, 6
          %s352 = sld [smem:[#allocation5 + %s351]]
          %s353 = scalar_lea.hbm %s1, %s352
          %s354 = sadd.s32 6, %s245
          %s355 = scalar_lea.vmem [#allocation2], %s354
          // Predicated region
          $region77: #{tpu_custom_call.1} parent=51 // pred_check
            _
          $region78: #{tpu_custom_call.1} parent=51 // pred_check_branch
            %357 = sbr.rel target = $region80
          $region79: #{tpu_custom_call.1} parent=51 // pred_region
            %358 = sst [smem:[#allocation10]] [#allocation39]
            %359 = sst [smem:[#allocation11]] [#allocation38]
          $region80: #{tpu_custom_call.1} parent=51 // pred_fallthru
            _
          %361 = shalt.err (0)
          %s363 = sshll.u32 %s353, 4
          %s364 = int_to_ptr.hbm [resolvable:$true] %s363
          %s365 = sshll.u32 %s355, 4
          %s366 = int_to_ptr.vmem [resolvable:$true] %s365
          %368 = dma.hbm_to_vmem [thread:$0]  %s364, 16, %s366, %s247
          %s369 = sadd.s32 %s242, 7
          %s370 = sld [smem:[#allocation5 + %s369]]
          %s371 = scalar_lea.hbm %s1, %s370
          %s372 = sadd.s32 7, %s245
          %s373 = scalar_lea.vmem [#allocation2], %s372
          // Predicated region
          $region81: #{tpu_custom_call.1} parent=51 // pred_check
            _
          $region82: #{tpu_custom_call.1} parent=51 // pred_check_branch
            %375 = sbr.rel target = $region84
          $region83: #{tpu_custom_call.1} parent=51 // pred_region
            %376 = sst [smem:[#allocation10]] [#allocation41]
            %377 = sst [smem:[#allocation11]] [#allocation40]
          $region84: #{tpu_custom_call.1} parent=51 // pred_fallthru
            _
          %379 = shalt.err (0)
          %s381 = sshll.u32 %s371, 4
          %s382 = int_to_ptr.hbm [resolvable:$true] %s381
          %s383 = sshll.u32 %s373, 4
          %s384 = int_to_ptr.vmem [resolvable:$true] %s383
          %386 = dma.hbm_to_vmem [thread:$0]  %s382, 16, %s384, %s247
        $region52: #{tpu_custom_call.1} parent=11 // pred_fallthru
          _
        %s387 = smul.u32 %s85, 8
        %s388 = scalar_lea.vmem [#allocation2], %s387
        %s389 = scalar_lea.sflag [#allocation3], %s85
        %s390 = smul.u32 8, 1
        %s391 = sshll.u32 %s390, 4
        %392 = dma.done %s389, %s391
        %v393 = vld [vmem:[%s388] sm:$0xff]
        %v394 = vmul.f32 %v393, 11.313708
        %395 = vst [vmem:[%s69] sm:$0xff] %v394
        %s396 = sand.u32 %s42, 1
        %s397 = scalar_lea.sflag [#allocation7], %s396
        %s398 = sand.u32 %s42, 1
        %s399 = smul.addr %s398, 8
        %s400 = scalar_lea.vmem [#allocation6], %s399
        // Predicated region
        $region85: #{tpu_custom_call.1} parent=11 // pred_check
          %p401 = pneg %p48
        $region86: #{tpu_custom_call.1} parent=11 // pred_check_branch
          %403 = sbr.rel (%p401) target = $region88
        $region87: #{tpu_custom_call.1} parent=11 // pred_region
          %s404 = smul.u32 %s25, 4
          %s405 = sadd.s32 %s404, %s26
          %407 = vsyncadd %s397, 0
          %s408 = smul.addr %s405, 8
          %s409 = scalar_lea.hbm %s2, %s408
          %s411 = sshll.u32 %s400, 4
          %s412 = int_to_ptr.vmem [resolvable:$true] %s411
          %s413 = sshll.u32 %s409, 4
          %s414 = int_to_ptr.hbm [resolvable:$true] %s413
          %416 = dma.vmem_to_hbm [thread:$0]  %s412, 128, %s414, %s397
        $region88: #{tpu_custom_call.1} parent=11 // pred_fallthru
          _
      $region12: #{tpu_custom_call.1} parent=5 // pred_fallthru
        _
      %p417 = scmp.le.s32.totalorder 1, %s19
      // Predicated region
      $region89: #{tpu_custom_call.1} parent=5 // pred_check
        %p418 = pneg %p417
      $region90: #{tpu_custom_call.1} parent=5 // pred_check_branch
        %420 = sbr.rel (%p418) target = $region92
      $region91: #{tpu_custom_call.1} parent=5 // pred_region
        %s421 = ssub.s32 %s19, 1
        // Predicated region
        $region93: #{tpu_custom_call.1} parent=91 // pred_check
          %p422 = pneg %p54
        $region94: #{tpu_custom_call.1} parent=91 // pred_check_branch
          %424 = sbr.rel (%p422) target = $region96
        $region95: #{tpu_custom_call.1} parent=91 // pred_region
          %s425 = sand.u32 %s45, 1
          %s426 = scalar_lea.sflag [#allocation7], %s425
          %s427 = sand.u32 %s45, 1
          %s428 = smul.addr %s427, 8
          %s429 = scalar_lea.vmem [#allocation6], %s428
          %431 = dma.done %s426, 128
        $region96: #{tpu_custom_call.1} parent=91 // pred_fallthru
          _
      $region92: #{tpu_custom_call.1} parent=5 // pred_fallthru
        _
    $region6: #{tpu_custom_call.1} parent=1 // loop_footer
      %s23 = sadd.s32 1, %s19
    $region7: #{tpu_custom_call.1} parent=1 // loop_footer_branch
      %18 = sbr.rel target = $region3
    $region8: #{tpu_custom_call.1} parent=1 // loop_exit
      _
    %432 = vsyncpa [#allocation7], 1
    %s433 = scalar_lea.sflag [#allocation7], 1
    %434 = vsyncpa %s433, 1
  %435 = vsyncmov [#allocation3]
  %s436 = vpop.sfrf %435
  %p437 = scmp.eq.s32.totalorder %s436, 0
  %p438 = pneg %p437
  %440 = shalt.err (%p438)
  %s441 = scalar_lea.sflag [#allocation3], 1
  %442 = vsyncmov %s441
  %s443 = vpop.sfrf %442
  %p444 = scmp.eq.s32.totalorder %s443, 0
  %p445 = pneg %p444
  %447 = shalt.err (%p445)

</llo_original>
